<compile_context>
chip_gen: v7x
topology: tpu7x:2x2x1
jax: 0.10.0
libtpu: 0.0.40
codegen_flags: <defaults>
</compile_context>

<pallas_src>
import math
from functools import partial

import jax
import jax.numpy as jnp
from jax.experimental import pallas as pl
from jax.experimental.pallas import tpu as pltpu

ACT_DTYPE = jnp.bfloat16            # activation / pointwise-weight storage dtype
_VMEM_LIMIT = 48 * 1024 * 1024      # stays under v7x's 64 MiB physical VMEM
_M_TILE_PREF = 512                  # preferred M tile for the pointwise matmuls


def _make_divisible(v, divisor, min_value=None):
    if min_value is None:
        min_value = divisor
    new_v = max(min_value, int(v + divisor / 2) // divisor * divisor)
    if new_v < 0.9 * v:
        new_v += divisor
    return new_v


def _round_up(v, d):
    return (v + d - 1) // d * d


def _pick_m_tile(m, pref=_M_TILE_PREF):
    tm = pref if m >= pref else _round_up(m, 8)
    return _round_up(m, tm), tm


def _cparams(num_parallel_axes=0):
    kwargs = dict(vmem_limit_bytes=_VMEM_LIMIT)
    if num_parallel_axes:
        kwargs["dimension_semantics"] = ("parallel",) * num_parallel_axes
    return pltpu.CompilerParams(**kwargs)


def _nbytes(*arrs):
    return int(sum(int(a.size) * jnp.dtype(a.dtype).itemsize for a in arrs))


# ----------------------------- Pallas kernels ------------------------------

def _mm_kernel(x_ref, w_ref, b_ref, o_ref, *, relu6):
    y = jnp.dot(x_ref[...], w_ref[...], preferred_element_type=jnp.float32)
    y = y + b_ref[...]
    if relu6:
        y = jnp.clip(y, 0.0, 6.0)
    o_ref[...] = y.astype(o_ref.dtype)


def matmul_bias_act(x, w, b, relu6, out_dtype):
    """x:(M,K) @ w:(K,N) + b, optional ReLU6; tiled over M, full K/N per tile."""
    m, k = x.shape
    n = w.shape[1]
    mp, tm = _pick_m_tile(m)
    xpad = jnp.pad(x, ((0, mp - m), (0, 0))) if mp != m else x
    cost = pl.CostEstimate(
        flops=2 * mp * k * n, transcendentals=0,
        bytes_accessed=_nbytes(xpad, w, b) + int(mp * n * jnp.dtype(out_dtype).itemsize))
    out = pl.pallas_call(
        partial(_mm_kernel, relu6=relu6),
        out_shape=jax.ShapeDtypeStruct((mp, n), out_dtype),
        grid=(mp // tm,),
        in_specs=[
            pl.BlockSpec((tm, k), lambda i: (i, 0)),
            pl.BlockSpec((k, n), lambda i: (0, 0)),
            pl.BlockSpec((1, n), lambda i: (0, 0)),
        ],
        out_specs=pl.BlockSpec((tm, n), lambda i: (i, 0)),
        compiler_params=_cparams(1),
        cost_estimate=cost,
    )(xpad, w, b.reshape(1, n))
    return out if mp == m else out[:m]


def _dual_mm_kernel(x_ref, w1_ref, b1_ref, w2_ref, b2_ref, o_ref, *, relu6):
    # Fused pair of 1x1 convs: (x @ w1 + b1) -> (.. @ w2 + b2) [+ ReLU6].
    # The hidden activation lives only in VMEM, never in HBM.
    hid = jnp.dot(x_ref[...], w1_ref[...], preferred_element_type=jnp.float32)
    hid = hid + b1_ref[...]
    y = jnp.dot(hid.astype(w2_ref.dtype), w2_ref[...],
                preferred_element_type=jnp.float32)
    y = y + b2_ref[...]
    if relu6:
        y = jnp.clip(y, 0.0, 6.0)
    o_ref[...] = y.astype(o_ref.dtype)


def dual_matmul_bias_act(x, w1, b1, w2, b2, relu6, out_dtype):
    m, k = x.shape
    h = w1.shape[1]
    n = w2.shape[1]
    mp, tm = _pick_m_tile(m)
    xpad = jnp.pad(x, ((0, mp - m), (0, 0))) if mp != m else x
    cost = pl.CostEstimate(
        flops=2 * mp * (k * h + h * n), transcendentals=0,
        bytes_accessed=_nbytes(xpad, w1, b1, w2, b2)
        + int(mp * n * jnp.dtype(out_dtype).itemsize))
    out = pl.pallas_call(
        partial(_dual_mm_kernel, relu6=relu6),
        out_shape=jax.ShapeDtypeStruct((mp, n), out_dtype),
        grid=(mp // tm,),
        in_specs=[
            pl.BlockSpec((tm, k), lambda i: (i, 0)),
            pl.BlockSpec((k, h), lambda i: (0, 0)),
            pl.BlockSpec((1, h), lambda i: (0, 0)),
            pl.BlockSpec((h, n), lambda i: (0, 0)),
            pl.BlockSpec((1, n), lambda i: (0, 0)),
        ],
        out_specs=pl.BlockSpec((tm, n), lambda i: (i, 0)),
        compiler_params=_cparams(1),
        cost_estimate=cost,
    )(xpad, w1, b1.reshape(1, h), w2, b2.reshape(1, n))
    return out if mp == m else out[:m]


def _dwconv_kernel(*refs, stride, relu6, has_res, ident_k):
    # Depthwise 3x3 conv (+BN folded) with optional ReLU6 and optional fused
    # residual / identity-channel blend.  f32 accumulation, bf16 in/out.
    if has_res:
        x_ref, w_ref, b_ref, r_ref, o_ref = refs
    else:
        x_ref, w_ref, b_ref, o_ref = refs
        r_ref = None
    _, ho, wo, c = o_ref.shape
    x = x_ref[0]                       # (Hp, Wp, C) padded input
    w = w_ref[...]                     # (3, 3, C)
    acc = jnp.zeros((ho, wo, c), jnp.float32)
    if stride == 1:
        for dy in range(3):
            for dx in range(3):
                patch = x[dy:dy + ho, dx:dx + wo, :].astype(jnp.float32)
                acc = acc + patch * w[dy, dx]
    else:
        # Rows subsampled in-kernel: split the (even) padded H axis so that
        # input row 2*i + dy == xr[i + dy // 2, dy % 2].  Column subsampling
        # (stride 2 along W) happens in the wrapper.
        hp, wp = x.shape[0], x.shape[1]
        xr = x.reshape(hp // 2, 2, wp, c)
        for dy in range(3):
            slab = xr[dy // 2:dy // 2 + ho, dy % 2]     # (ho, Wp, C)
            for dx in range(3):
                patch = slab[:, dx:dx + wo, :].astype(jnp.float32)
                acc = acc + patch * w[dy, dx]
    acc = acc + b_ref[...]
    if relu6:
        acc = jnp.clip(acc, 0.0, 6.0)
    if has_res:
        res = r_ref[0].astype(jnp.float32)
        if ident_k is not None:
            ch = jax.lax.broadcasted_iota(jnp.int32, (1, 1, c), 2)
            res = jnp.where(ch < ident_k, res, 0.0)
        acc = acc + res
    o_ref[0] = acc.astype(o_ref.dtype)


def depthwise3x3_bn(x, w, b, stride, relu6, residual=None, identity_channels=None):
    """Depthwise 3x3 conv + folded BN (+ReLU6) (+fused residual), NHWC."""
    n, h, wdt, c = x.shape
    assert stride in (1, 2)
    assert residual is None or stride == 1
    pad_bottom = 1
    if stride == 2 and (h + 2) % 2 != 0:
        pad_bottom = 2                 # keep padded H even for the row split
    hp = h + 1 + pad_bottom
    wp = wdt + 2
    xp = jnp.pad(x, ((0, 0), (1, pad_bottom), (1, 1), (0, 0)))
    ho = h if stride == 1 else (h - 1) // 2 + 1
    wo = wdt                           # column subsample (stride 2) in wrapper
    has_res = residual is not None

    in_specs = [
        pl.BlockSpec((1, hp, wp, c), lambda i: (i, 0, 0, 0)),
        pl.BlockSpec((3, 3, c), lambda i: (0, 0, 0)),
        pl.BlockSpec((1, c), lambda i: (0, 0)),
    ]
    inputs = [xp, w, b.reshape(1, c)]
    if has_res:
        in_specs.append(pl.BlockSpec((1, ho, wo, c), lambda i: (i, 0, 0, 0)))
        inputs.append(residual)

    act_bytes = int(n * ho * wo * c * jnp.dtype(x.dtype).itemsize)
    cost = pl.CostEstimate(
        flops=2 * 9 * n * ho * wo * c, transcendentals=0,
        bytes_accessed=_nbytes(xp, w, b) + (2 if has_res else 1) * act_bytes)

    out = pl.pallas_call(
        partial(_dwconv_kernel, stride=stride, relu6=relu6,
                has_res=has_res, ident_k=identity_channels),
        out_shape=jax.ShapeDtypeStruct((n, ho, wo, c), x.dtype),
        grid=(n,),
        in_specs=in_specs,
        out_specs=pl.BlockSpec((1, ho, wo, c), lambda i: (i, 0, 0, 0)),
        compiler_params=_cparams(1),
        cost_estimate=cost,
    )(*inputs)
    if stride == 2:
        # TODO(synk): move the stride-2 column subsample in-kernel as well
        # (sublane-strided gather); rows are already subsampled in-kernel.
        out = out[:, :, ::2, :]
    return out


def _avgpool_kernel(x_ref, o_ref):
    o_ref[...] = jnp.mean(x_ref[...].astype(jnp.float32), axis=(1, 2))


def global_avgpool(x):
    n, h, w, c = x.shape
    return pl.pallas_call(
        _avgpool_kernel,
        out_shape=jax.ShapeDtypeStruct((n, c), jnp.float32),
        compiler_params=pltpu.CompilerParams(vmem_limit_bytes=_VMEM_LIMIT),
    )(x)


# ------------------------------ glue wrappers -------------------------------

def pointwise_bn(x, w, b, relu6):
    n, h, wdt, cin = x.shape
    cout = w.shape[1]
    y = matmul_bias_act(x.reshape(n * h * wdt, cin), w, b, relu6, out_dtype=x.dtype)
    return y.reshape(n, h, wdt, cout)


def stem_conv3x3_s2(x, w, b):
    # 3x3 conv, stride 2, pad 1, + folded BN + ReLU6 via im2col matmul.
    # TODO(synk): build the 9*Cin im2col patches inside a Pallas kernel; with
    # Cin=3 the duplicated patch tensor is tiny, so it is built in the wrapper.
    n, h, wdt, cin = x.shape
    cout = w.shape[-1]
    ho = (h - 1) // 2 + 1
    wo = (wdt - 1) // 2 + 1
    xp = jnp.pad(x, ((0, 0), (1, 1), (1, 1), (0, 0)))
    cols = []
    for dy in range(3):
        for dx in range(3):
            cols.append(xp[:, dy:dy + 2 * (ho - 1) + 1:2,
                           dx:dx + 2 * (wo - 1) + 1:2, :])
    patches = jnp.concatenate(cols, axis=-1).reshape(n * ho * wo, 9 * cin)
    y = matmul_bias_act(patches, w.reshape(9 * cin, cout), b, relu6=True,
                        out_dtype=x.dtype)
    return y.reshape(n, ho, wo, cout)


# ----------------------------- parameter setup ------------------------------

_BN_EPS = 1e-5
_BN_SCALE = 1.0 / math.sqrt(1.0 + _BN_EPS)  # gamma=1, var=1, mean=0, beta=0


class KeyGen:
    def __init__(self, key):
        self._key = key

    def __call__(self):
        self._key, sub = jax.random.split(self._key)
        return sub


def _kaiming(key, shape, fan_out):
    return jax.random.normal(key, shape, jnp.float32) * math.sqrt(2.0 / fan_out)


def make_dw3x3(kg, c):
    w = _kaiming(kg(), (3, 3, c), fan_out=c * 9) * _BN_SCALE
    return dict(w=w, b=jnp.zeros((c,), jnp.float32))


def make_pw(kg, cin, cout):
    w = (_kaiming(kg(), (cin, cout), fan_out=cout) * _BN_SCALE).astype(ACT_DTYPE)
    return dict(w=w, b=jnp.zeros((cout,), jnp.float32))


def make_full3x3(kg, cin, cout):
    w = (_kaiming(kg(), (3, 3, cin, cout), fan_out=cout * 9) * _BN_SCALE).astype(ACT_DTYPE)
    return dict(w=w, b=jnp.zeros((cout,), jnp.float32))


def build_sandglass(kg, inp, oup, stride, expand_ratio,
                    identity_tensor_multiplier, keep_3x3):
    assert stride in (1, 2)
    use_identity = identity_tensor_multiplier != 1.0
    identity_channels = int(round(inp * identity_tensor_multiplier))
    hidden_dim = inp // expand_ratio
    if hidden_dim < oup / 6.0:
        hidden_dim = math.ceil(oup / 6.0)
        hidden_dim = _make_divisible(hidden_dim, 16)
    use_res_connect = stride == 1 and inp == oup
    has_first_dw = expand_ratio == 2 or inp == oup or keep_3x3
    has_last_dw = expand_ratio == 2 or inp == oup or keep_3x3 or stride == 2

    dw1 = make_dw3x3(kg, inp) if has_first_dw else None          # DW+BN+ReLU6
    pw1 = make_pw(kg, inp, hidden_dim) if expand_ratio != 1 else None  # 1x1+BN
    pw2 = make_pw(kg, hidden_dim, oup)                           # 1x1+BN+ReLU6
    dw2 = make_dw3x3(kg, oup) if has_last_dw else None           # DW+BN
    return dict(dw1=dw1, pw1=pw1, pw2=pw2, dw2=dw2, stride=stride,
                use_res_connect=use_res_connect, use_identity=use_identity,
                identity_channels=identity_channels)


def sandglass_forward(blk, x):
    out = x
    if blk['dw1'] is not None:
        out = depthwise3x3_bn(out, blk['dw1']['w'], blk['dw1']['b'],
                              stride=1, relu6=True)
    n, h, wdt, cin = out.shape
    if blk['pw1'] is not None:
        cout = blk['pw2']['w'].shape[1]
        y = dual_matmul_bias_act(out.reshape(n * h * wdt, cin),
                                 blk['pw1']['w'], blk['pw1']['b'],
                                 blk['pw2']['w'], blk['pw2']['b'],
                                 relu6=True, out_dtype=out.dtype)
        out = y.reshape(n, h, wdt, cout)
    else:
        out = pointwise_bn(out, blk['pw2']['w'], blk['pw2']['b'], relu6=True)

    res = x if blk['use_res_connect'] else None
    ident_k = (blk['identity_channels']
               if (res is not None and blk['use_identity']) else None)
    if blk['dw2'] is not None:
        fuse_res = res if blk['stride'] == 1 else None
        out = depthwise3x3_bn(out, blk['dw2']['w'], blk['dw2']['b'],
                              stride=blk['stride'], relu6=False,
                              residual=fuse_res, identity_channels=ident_k)
        if fuse_res is not None:
            res = None
    if res is not None:
        # Fallback path (never hit with the default sand-glass settings, where
        # every residual block ends in a depthwise conv with a fused epilogue).
        r = res.astype(jnp.float32)
        if ident_k is not None:
            ch = jax.lax.broadcasted_iota(jnp.int32, (1, 1, 1, r.shape[-1]), 3)
            r = jnp.where(ch < ident_k, r, 0.0)
        out = (out.astype(jnp.float32) + r).astype(out.dtype)
    return out


def build_mobilenext(key, num_classes=1000, width_mult=1.0,
                     identity_tensor_multiplier=1.0, round_nearest=8):
    kg = KeyGen(key)
    input_channel = _make_divisible(32 * width_mult, round_nearest)
    last_channel = _make_divisible(1280 * max(1.0, width_mult), round_nearest)
    sand_glass_setting = [
        [2, 96, 1, 2], [6, 144, 1, 1], [6, 192, 3, 2], [6, 288, 3, 2],
        [6, 384, 4, 1], [6, 576, 4, 2], [6, 960, 2, 1],
        [6, last_channel / width_mult, 1, 1],
    ]
    stem = make_full3x3(kg, 3, input_channel)
    blocks = []
    for t, c, b, s in sand_glass_setting:
        output_channel = _make_divisible(c * width_mult, round_nearest)
        for i in range(b):
            stride = s if i == 0 else 1
            blocks.append(build_sandglass(
                kg, input_channel, output_channel, stride, expand_ratio=t,
                identity_tensor_multiplier=identity_tensor_multiplier,
                keep_3x3=(b == 1 and s == 1 and i == 0)))
            input_channel = output_channel
    fc_w = jax.random.normal(kg(), (last_channel, num_classes), jnp.float32) * 0.01
    fc_b = jnp.zeros((num_classes,), jnp.float32)
    return dict(stem=stem, blocks=blocks, fc_w=fc_w, fc_b=fc_b)


def mobilenext_forward(params, x_nchw):
    # TODO(synk): Dropout(0.2) and BatchNorm use eval semantics (dropout is
    # identity; BN running stats are folded into the conv weights/biases).
    x = jnp.transpose(x_nchw, (0, 2, 3, 1)).astype(ACT_DTYPE)  # NCHW -> NHWC
    x = stem_conv3x3_s2(x, params['stem']['w'], params['stem']['b'])
    for blk in params['blocks']:
        x = sandglass_forward(blk, x)
    pooled = global_avgpool(x)                                  # (N, C) f32
    logits = matmul_bias_act(pooled, params['fc_w'], params['fc_b'],
                             relu6=False, out_dtype=jnp.float32)
    return logits


if __name__ == "__main__":
    root = jax.random.PRNGKey(0)
    k_params, k_input = jax.random.split(root)
    params = build_mobilenext(k_params, num_classes=10)
    # Small input consistent with the module's NCHW image input.
    x = jax.random.normal(k_input, (2, 3, 32, 32), jnp.float32)
    logits = mobilenext_forward(params, x)
    logits = jax.block_until_ready(logits)
    assert logits.shape == (2, 10)
    assert bool(jnp.all(jnp.isfinite(logits)))
    print("KERNEL_OK")
</pallas_src>

<mosaic_0001>
module attributes {stable_mosaic.version = 11 : i64} {
  func.func @_mm_kernel(%arg0: i32, %arg1: memref<512x27xbf16, #tpu.memory_space<vmem>>, %arg2: memref<27x32xbf16, #tpu.memory_space<vmem>>, %arg3: memref<1x32xf32, #tpu.memory_space<vmem>>, %arg4: memref<512x32xbf16, #tpu.memory_space<vmem>>) attributes {dimension_semantics = [#tpu.dimension_semantics<parallel>], iteration_bounds = array<i64: 1>, scalar_prefetch = 0 : i64, scratch_operands = 0 : i64, tpu.core_type = #tpu.core_type<tc>, window_params = [{transform_indices = @transform_0, window_bounds = array<i64: 512, 27>}, {pipeline_mode = #tpu.pipeline_mode<synchronous>, transform_indices = @transform_1, window_bounds = array<i64: 27, 32>}, {pipeline_mode = #tpu.pipeline_mode<synchronous>, transform_indices = @transform_2, window_bounds = array<i64: 1, 32>}, {transform_indices = @transform_3, window_bounds = array<i64: 512, 32>}]} {
    %c0 = arith.constant 0 : index
    %c0_0 = arith.constant 0 : index
    %0 = vector.load %arg1[%c0, %c0_0] : memref<512x27xbf16, #tpu.memory_space<vmem>>, vector<512x27xbf16>
    %c0_1 = arith.constant 0 : index
    %c0_2 = arith.constant 0 : index
    %1 = vector.load %arg2[%c0_1, %c0_2] : memref<27x32xbf16, #tpu.memory_space<vmem>>, vector<27x32xbf16>
    %cst = arith.constant dense<0.000000e+00> : vector<512x32xf32>
    %2 = tpu.matmul %0, %1, %cst {dimension_numbers = #tpu.dot_dimension_numbers<[1], [0], [0], [1], [0, 0, 1, 1], [], []>} : vector<512x27xbf16>, vector<27x32xbf16>, vector<512x32xf32> -> vector<512x32xf32>
    %c0_3 = arith.constant 0 : index
    %c0_4 = arith.constant 0 : index
    %3 = vector.load %arg3[%c0_3, %c0_4] : memref<1x32xf32, #tpu.memory_space<vmem>>, vector<1x32xf32>
    %4 = vector.broadcast %3 : vector<1x32xf32> to vector<512x32xf32>
    %5 = arith.addf %2, %4 : vector<512x32xf32>
    %cst_5 = arith.constant 0.000000e+00 : f32
    %cst_6 = arith.constant 6.000000e+00 : f32
    %6 = vector.broadcast %cst_5 : f32 to vector<512x32xf32>
    %7 = arith.maximumf %6, %5 : vector<512x32xf32>
    %8 = vector.broadcast %cst_6 : f32 to vector<512x32xf32>
    %9 = arith.minimumf %8, %7 : vector<512x32xf32>
    %10 = arith.truncf %9 : vector<512x32xf32> to vector<512x32xbf16>
    %c0_7 = arith.constant 0 : index
    %c0_8 = arith.constant 0 : index
    %11 = vector.load %arg4[%c0_7, %c0_8] : memref<512x32xbf16, #tpu.memory_space<vmem>>, vector<512x32xbf16>
    tpu.vector_store %arg4[%c0_7, %c0_8], %10 {strides = array<i32>} : memref<512x32xbf16, #tpu.memory_space<vmem>>, vector<512x32xbf16>,
    return
  }
  func.func @transform_0(%arg0: i32) -> (i32, i32) {
    %c0_i32 = arith.constant 0 : i32
    %c0_i32_0 = arith.constant 0 : i32
    return %arg0, %c0_i32 : i32, i32
  }
  func.func @transform_1(%arg0: i32) -> (i32, i32) {
    %c0_i32 = arith.constant 0 : i32
    %c0_i32_0 = arith.constant 0 : i32
    %c0_i32_1 = arith.constant 0 : i32
    return %c0_i32, %c0_i32_0 : i32, i32
  }
  func.func @transform_2(%arg0: i32) -> (i32, i32) {
    %c0_i32 = arith.constant 0 : i32
    %c0_i32_0 = arith.constant 0 : i32
    %c0_i32_1 = arith.constant 0 : i32
    return %c0_i32, %c0_i32_0 : i32, i32
  }
  func.func @transform_3(%arg0: i32) -> (i32, i32) {
    %c0_i32 = arith.constant 0 : i32
    %c0_i32_0 = arith.constant 0 : i32
    return %arg0, %c0_i32 : i32, i32
  }
}

</mosaic_0001>

<llo_original>
// kernel: tpu_custom_call.1
$region0: #{tpu_custom_call.1}
  #allocation0 [shape = 'u32[]', space=smem, size = 0x4, offset = 0x4, fixed_abs, tag = 'smem constant byte address 0x4 - core index']
  #allocation1 [shape = 'u32[144,128]{1,0:T(1,128)}', space=vmem, size = 0x12000, scoped, tag = 'internal scratch']
  %s0 = inlined_call_operand.vmem [shape: bf16[512,27], index: 0, kind: input, shape index: {}]
  %s1 = inlined_call_operand.vmem [shape: bf16[27,32], index: 1, kind: input, shape index: {}]
  %s2 = inlined_call_operand.vmem [shape: f32[1,32], index: 2, kind: input, shape index: {}]
  %s3 = inlined_call_operand.vmem [shape: bf16[512,32], index: 3, kind: output, shape index: {}]
  %s4 = sld [smem:[#allocation0]]
  $region22: #{tpu_custom_call.1} parent=0
    _
  %s6 = ssub.s32 1, %s4
  %s7 = scalar_select 0, %s6, %s4
  // Predicated region
  $region2: #{tpu_custom_call.1} parent=0 // pred_check
    _
  $region3: #{tpu_custom_call.1} parent=0 // pred_check_branch
    %9 = sbr.rel (0) target = $region5
  $region4: #{tpu_custom_call.1} parent=0 // pred_region
    _
  $region5: #{tpu_custom_call.1} parent=0 // pred_fallthru
    _
  // Predicated region
  $region6: #{tpu_custom_call.1} parent=0 // pred_check
    _
  $region7: #{tpu_custom_call.1} parent=0 // pred_check_branch
    %11 = sbr.rel (0) target = $region9
  $region8: #{tpu_custom_call.1} parent=0 // pred_region
    _
  $region9: #{tpu_custom_call.1} parent=0 // pred_fallthru
    _
  // Predicated region
  $region10: #{tpu_custom_call.1} parent=0 // pred_check
    _
  $region11: #{tpu_custom_call.1} parent=0 // pred_check_branch
    %13 = sbr.rel (0) target = $region13
  $region12: #{tpu_custom_call.1} parent=0 // pred_region
    _
  $region13: #{tpu_custom_call.1} parent=0 // pred_fallthru
    _
  %v15 = vld [vmem:[%s0] sm:$0xf]
  %v16 = vld [vmem:[%s0 + $0x4] sm:$0xf]
  %v17 = vld [vmem:[%s0 + $0x8] sm:$0xf]
  %v18 = vld [vmem:[%s0 + $0xc] sm:$0xf]
  %v19 = vld [vmem:[%s0 + $0x10] sm:$0xf]
  %v20 = vld [vmem:[%s0 + $0x14] sm:$0xf]
  %v21 = vld [vmem:[%s0 + $0x18] sm:$0xf]
  %v22 = vld [vmem:[%s0 + $0x1c] sm:$0xf]
  %v23 = vld [vmem:[%s0 + $0x20] sm:$0xf]
  %v24 = vld [vmem:[%s0 + $0x24] sm:$0xf]
  %v25 = vld [vmem:[%s0 + $0x28] sm:$0xf]
  %v26 = vld [vmem:[%s0 + $0x2c] sm:$0xf]
  %v27 = vld [vmem:[%s0 + $0x30] sm:$0xf]
  %v28 = vld [vmem:[%s0 + $0x34] sm:$0xf]
  %v29 = vld [vmem:[%s0 + $0x38] sm:$0xf]
  %v30 = vld [vmem:[%s0 + $0x3c] sm:$0xf]
  %v31 = vld [vmem:[%s0 + $0x40] sm:$0xf]
  %v32 = vld [vmem:[%s0 + $0x44] sm:$0xf]
  %v33 = vld [vmem:[%s0 + $0x48] sm:$0xf]
  %v34 = vld [vmem:[%s0 + $0x4c] sm:$0xf]
  %v35 = vld [vmem:[%s0 + $0x50] sm:$0xf]
  %v36 = vld [vmem:[%s0 + $0x54] sm:$0xf]
  %v37 = vld [vmem:[%s0 + $0x58] sm:$0xf]
  %v38 = vld [vmem:[%s0 + $0x5c] sm:$0xf]
  %v39 = vld [vmem:[%s0 + $0x60] sm:$0xf]
  %v40 = vld [vmem:[%s0 + $0x64] sm:$0xf]
  %v41 = vld [vmem:[%s0 + $0x68] sm:$0xf]
  %v42 = vld [vmem:[%s0 + $0x6c] sm:$0xf]
  %v43 = vld [vmem:[%s0 + $0x70] sm:$0xf]
  %v44 = vld [vmem:[%s0 + $0x74] sm:$0xf]
  %v45 = vld [vmem:[%s0 + $0x78] sm:$0xf]
  %v46 = vld [vmem:[%s0 + $0x7c] sm:$0xf]
  %v47 = vld [vmem:[%s0 + $0x80] sm:$0xf]
  %v48 = vld [vmem:[%s0 + $0x84] sm:$0xf]
  %v49 = vld [vmem:[%s0 + $0x88] sm:$0xf]
  %v50 = vld [vmem:[%s0 + $0x8c] sm:$0xf]
  %v51 = vld [vmem:[%s0 + $0x90] sm:$0xf]
  %v52 = vld [vmem:[%s0 + $0x94] sm:$0xf]
  %v53 = vld [vmem:[%s0 + $0x98] sm:$0xf]
  %v54 = vld [vmem:[%s0 + $0x9c] sm:$0xf]
  %v55 = vld [vmem:[%s0 + $0xa0] sm:$0xf]
  %v56 = vld [vmem:[%s0 + $0xa4] sm:$0xf]
  %v57 = vld [vmem:[%s0 + $0xa8] sm:$0xf]
  %v58 = vld [vmem:[%s0 + $0xac] sm:$0xf]
  %v59 = vld [vmem:[%s0 + $0xb0] sm:$0xf]
  %v60 = vld [vmem:[%s0 + $0xb4] sm:$0xf]
  %v61 = vld [vmem:[%s0 + $0xb8] sm:$0xf]
  %v62 = vld [vmem:[%s0 + $0xbc] sm:$0xf]
  %v63 = vld [vmem:[%s0 + $0xc0] sm:$0xf]
  %v64 = vld [vmem:[%s0 + $0xc4] sm:$0xf]
  %v65 = vld [vmem:[%s0 + $0xc8] sm:$0xf]
  %v66 = vld [vmem:[%s0 + $0xcc] sm:$0xf]
  %v67 = vld [vmem:[%s0 + $0xd0] sm:$0xf]
  %v68 = vld [vmem:[%s0 + $0xd4] sm:$0xf]
  %v69 = vld [vmem:[%s0 + $0xd8] sm:$0xf]
  %v70 = vld [vmem:[%s0 + $0xdc] sm:$0xf]
  %v71 = vld [vmem:[%s0 + $0xe0] sm:$0xf]
  %v72 = vld [vmem:[%s0 + $0xe4] sm:$0xf]
  %v73 = vld [vmem:[%s0 + $0xe8] sm:$0xf]
  %v74 = vld [vmem:[%s0 + $0xec] sm:$0xf]
  %v75 = vld [vmem:[%s0 + $0xf0] sm:$0xf]
  %v76 = vld [vmem:[%s0 + $0xf4] sm:$0xf]
  %v77 = vld [vmem:[%s0 + $0xf8] sm:$0xf]
  %v78 = vld [vmem:[%s0 + $0xfc] sm:$0xf]
  %v79 = vld [vmem:[%s1] sm:$0xf]
  %v80 = vld [vmem:[%s1 + $0x4] sm:$0xf]
  %v81 = vld [vmem:[%s1 + $0x8] sm:$0xf]
  %v82 = vld [vmem:[%s1 + $0xc] sm:$0x3]
  %v83 = vld [vmem:[%s2] sm:$0x1]
  %v85 = vlaneseq
  %v86 = vshrl.u32 %v85, 7
  %v87 = vsub.s32 0, %v86
  %v88 = vrot.slane %v83, %v87
  %v154 = vunpack.c.l.b16 %v15
  %v155 = vunpack.c.l.b16 %v16
  %v156 = vunpack.c.l.b16 %v17
  %v157 = vunpack.c.l.b16 %v18
  %v158 = vunpack.c.l.b16 %v19
  %v159 = vunpack.c.l.b16 %v20
  %v160 = vunpack.c.l.b16 %v21
  %v161 = vunpack.c.l.b16 %v22
  %v162 = vunpack.c.l.b16 %v23
  %v163 = vunpack.c.l.b16 %v24
  %v164 = vunpack.c.l.b16 %v25
  %v165 = vunpack.c.l.b16 %v26
  %v166 = vunpack.c.l.b16 %v27
  %v167 = vunpack.c.l.b16 %v28
  %v168 = vunpack.c.l.b16 %v29
  %v169 = vunpack.c.l.b16 %v30
  %v170 = vunpack.c.l.b16 %v31
  %v171 = vunpack.c.l.b16 %v32
  %v172 = vunpack.c.l.b16 %v33
  %v173 = vunpack.c.l.b16 %v34
  %v174 = vunpack.c.l.b16 %v35
  %v175 = vunpack.c.l.b16 %v36
  %v176 = vunpack.c.l.b16 %v37
  %v177 = vunpack.c.l.b16 %v38
  %v178 = vunpack.c.l.b16 %v39
  %v179 = vunpack.c.l.b16 %v40
  %v180 = vunpack.c.l.b16 %v41
  %v181 = vunpack.c.l.b16 %v42
  %v182 = vunpack.c.l.b16 %v43
  %v183 = vunpack.c.l.b16 %v44
  %v184 = vunpack.c.l.b16 %v45
  %v185 = vunpack.c.l.b16 %v46
  %v186 = vunpack.c.l.b16 %v47
  %v187 = vunpack.c.l.b16 %v48
  %v188 = vunpack.c.l.b16 %v49
  %v189 = vunpack.c.l.b16 %v50
  %v190 = vunpack.c.l.b16 %v51
  %v191 = vunpack.c.l.b16 %v52
  %v192 = vunpack.c.l.b16 %v53
  %v193 = vunpack.c.l.b16 %v54
  %v194 = vunpack.c.l.b16 %v55
  %v195 = vunpack.c.l.b16 %v56
  %v196 = vunpack.c.l.b16 %v57
  %v197 = vunpack.c.l.b16 %v58
  %v198 = vunpack.c.l.b16 %v59
  %v199 = vunpack.c.l.b16 %v60
  %v200 = vunpack.c.l.b16 %v61
  %v201 = vunpack.c.l.b16 %v62
  %v202 = vunpack.c.l.b16 %v63
  %v203 = vunpack.c.l.b16 %v64
  %v204 = vunpack.c.l.b16 %v65
  %v205 = vunpack.c.l.b16 %v66
  %v206 = vunpack.c.l.b16 %v67
  %v207 = vunpack.c.l.b16 %v68
  %v208 = vunpack.c.l.b16 %v69
  %v209 = vunpack.c.l.b16 %v70
  %v210 = vunpack.c.l.b16 %v71
  %v211 = vunpack.c.l.b16 %v72
  %v212 = vunpack.c.l.b16 %v73
  %v213 = vunpack.c.l.b16 %v74
  %v214 = vunpack.c.l.b16 %v75
  %v215 = vunpack.c.l.b16 %v76
  %v216 = vunpack.c.l.b16 %v77
  %v217 = vunpack.c.l.b16 %v78
  %v218 = vpack.c.b16 %v155, %v154
  %v219 = vpack.c.b16 %v157, %v156
  %v220 = vpack.c.b16 %v159, %v158
  %v221 = vpack.c.b16 %v161, %v160
  %v222 = vpack.c.b16 %v163, %v162
  %v223 = vpack.c.b16 %v165, %v164
  %v224 = vpack.c.b16 %v167, %v166
  %v225 = vpack.c.b16 %v169, %v168
  %v226 = vpack.c.b16 %v171, %v170
  %v227 = vpack.c.b16 %v173, %v172
  %v228 = vpack.c.b16 %v175, %v174
  %v229 = vpack.c.b16 %v177, %v176
  %v230 = vpack.c.b16 %v179, %v178
  %v231 = vpack.c.b16 %v181, %v180
  %v232 = vpack.c.b16 %v183, %v182
  %v233 = vpack.c.b16 %v185, %v184
  %v234 = vpack.c.b16 %v187, %v186
  %v235 = vpack.c.b16 %v189, %v188
  %v236 = vpack.c.b16 %v191, %v190
  %v237 = vpack.c.b16 %v193, %v192
  %v238 = vpack.c.b16 %v195, %v194
  %v239 = vpack.c.b16 %v197, %v196
  %v240 = vpack.c.b16 %v199, %v198
  %v241 = vpack.c.b16 %v201, %v200
  %v242 = vpack.c.b16 %v203, %v202
  %v243 = vpack.c.b16 %v205, %v204
  %v244 = vpack.c.b16 %v207, %v206
  %v245 = vpack.c.b16 %v209, %v208
  %v246 = vpack.c.b16 %v211, %v210
  %v247 = vpack.c.b16 %v213, %v212
  %v248 = vpack.c.b16 %v215, %v214
  %v249 = vpack.c.b16 %v217, %v216
  %v254 = vunpack.c.l.b16 %v79
  %v255 = vunpack.c.l.b16 %v80
  %v256 = vunpack.c.l.b16 %v81
  %v257 = vunpack.c.l.b16 %v82
  %v258 = vpack.c.b16 %v255, %v254
  %v259 = vpack.c.b16 %v257, %v256
  %vm261 = vcmask 220160
  %v263 = vsel %vm261, %v218, 0
  %v266 = vsel %vm261, %v219, 0
  %v269 = vsel %vm261, %v220, 0
  %v272 = vsel %vm261, %v221, 0
  %v275 = vsel %vm261, %v222, 0
  %v278 = vsel %vm261, %v223, 0
  %v281 = vsel %vm261, %v224, 0
  %v284 = vsel %vm261, %v225, 0
  %v287 = vsel %vm261, %v226, 0
  %v290 = vsel %vm261, %v227, 0
  %v293 = vsel %vm261, %v228, 0
  %v296 = vsel %vm261, %v229, 0
  %v299 = vsel %vm261, %v230, 0
  %v302 = vsel %vm261, %v231, 0
  %v305 = vsel %vm261, %v232, 0
  %v308 = vsel %vm261, %v233, 0
  %v311 = vsel %vm261, %v234, 0
  %v314 = vsel %vm261, %v235, 0
  %v317 = vsel %vm261, %v236, 0
  %v320 = vsel %vm261, %v237, 0
  %v323 = vsel %vm261, %v238, 0
  %v326 = vsel %vm261, %v239, 0
  %v329 = vsel %vm261, %v240, 0
  %v332 = vsel %vm261, %v241, 0
  %v335 = vsel %vm261, %v242, 0
  %v338 = vsel %vm261, %v243, 0
  %v341 = vsel %vm261, %v244, 0
  %v344 = vsel %vm261, %v245, 0
  %v347 = vsel %vm261, %v246, 0
  %v350 = vsel %vm261, %v247, 0
  %v353 = vsel %vm261, %v248, 0
  %v356 = vsel %vm261, %v249, 0
  %vm358 = vcmask 1044480
  %vm359 = vcmask 1045504
  %v360 = vsel %vm358, 4294967295, 65535
  %v361 = vsel %vm359, %v360, 0
  %v363 = vand.u32 %v259, %v361
  %365 = vmatprep.subr.bf16.mxu0 0
  %366 = vmatpush1.bf16.msra.mxu0 %v258
  %367 = vmatprep.subr.bf16.mxu0 0
  %368 = vmatpush1.bf16.msra.mxu0 %v363
  %369 = vmatprep.subr.bf16.mxu0 0
  %370 = vmatpush1.bf16.msra.mxu0 0
  %371 = vmatprep.subr.bf16.mxu0 0
  %372 = vmatpush1.bf16.msra.mxu0 0
  %373 = vmatprep.subr.bf16.mxu0 0
  %374 = vmatpush1.bf16.msra.mxu0 0
  %375 = vmatprep.subr.bf16.mxu0 0
  %376 = vmatpush1.bf16.msra.mxu0 0
  %377 = vmatprep.subr.bf16.mxu0 0
  %378 = vmatpush1.bf16.msra.mxu0 0
  %379 = vmatprep.subr.bf16.mxu0 0
  %380 = vmatpush1.bf16.msra.mxu0 0
  %381 = vmatprep.subr.bf16.mxu0 0
  %382 = vmatpush1.bf16.msra.mxu0 0
  %383 = vmatprep.subr.bf16.mxu0 0
  %384 = vmatpush1.bf16.msra.mxu0 0
  %385 = vmatprep.subr.bf16.mxu0 0
  %386 = vmatpush1.bf16.msra.mxu0 0
  %387 = vmatprep.subr.bf16.mxu0 0
  %388 = vmatpush1.bf16.msra.mxu0 0
  %389 = vmatprep.subr.bf16.mxu0 0
  %390 = vmatpush1.bf16.msra.mxu0 0
  %391 = vmatprep.subr.bf16.mxu0 0
  %392 = vmatpush1.bf16.msra.mxu0 0
  %393 = vmatprep.subr.bf16.mxu0 0
  %394 = vmatpush1.bf16.msra.mxu0 0
  %395 = vmatprep.subr.bf16.mxu0 0
  %396 = vmatpush1.bf16.msra.mxu0 0
  %397 = vmatprep.mubr.bf16.mxu0 0
  %398 = vmatmul.mubr.bf16.gmra.mrb[0].mxu0 %v263
  %v399 = vpop.f32.mrb[0].mxu0
  %v400 = vadd.f32 %v88, %v399
  %v401 = vpop.f32.mrb[0].mxu0
  %v402 = vpop.f32.mrb[0].mxu0
  %v403 = vadd.f32 %v88, %v402
  %v404 = vpop.f32.mrb[0].mxu0
  %405 = vmatprep.mubr.bf16.mxu0 0
  %406 = vmatmul.mubr.bf16.gmra.mrb[0].mxu0 %v266
  %v407 = vpop.f32.mrb[0].mxu0
  %v408 = vadd.f32 %v88, %v407
  %v409 = vpop.f32.mrb[0].mxu0
  %v410 = vpop.f32.mrb[0].mxu0
  %v411 = vadd.f32 %v88, %v410
  %v412 = vpop.f32.mrb[0].mxu0
  %413 = vmatprep.mubr.bf16.mxu0 0
  %414 = vmatmul.mubr.bf16.gmra.mrb[0].mxu0 %v269
  %v415 = vpop.f32.mrb[0].mxu0
  %v416 = vadd.f32 %v88, %v415
  %v417 = vpop.f32.mrb[0].mxu0
  %v418 = vpop.f32.mrb[0].mxu0
  %v419 = vadd.f32 %v88, %v418
  %v420 = vpop.f32.mrb[0].mxu0
  %421 = vmatprep.mubr.bf16.mxu0 0
  %422 = vmatmul.mubr.bf16.gmra.mrb[0].mxu0 %v272
  %v423 = vpop.f32.mrb[0].mxu0
  %v424 = vadd.f32 %v88, %v423
  %v425 = vpop.f32.mrb[0].mxu0
  %v426 = vpop.f32.mrb[0].mxu0
  %v427 = vadd.f32 %v88, %v426
  %v428 = vpop.f32.mrb[0].mxu0
  %429 = vmatprep.mubr.bf16.mxu0 0
  %430 = vmatmul.mubr.bf16.gmra.mrb[0].mxu0 %v275
  %v431 = vpop.f32.mrb[0].mxu0
  %v432 = vadd.f32 %v88, %v431
  %v433 = vpop.f32.mrb[0].mxu0
  %v434 = vpop.f32.mrb[0].mxu0
  %v435 = vadd.f32 %v88, %v434
  %v436 = vpop.f32.mrb[0].mxu0
  %437 = vmatprep.mubr.bf16.mxu0 0
  %438 = vmatmul.mubr.bf16.gmra.mrb[0].mxu0 %v278
  %v439 = vpop.f32.mrb[0].mxu0
  %v440 = vadd.f32 %v88, %v439
  %v441 = vpop.f32.mrb[0].mxu0
  %v442 = vpop.f32.mrb[0].mxu0
  %v443 = vadd.f32 %v88, %v442
  %v444 = vpop.f32.mrb[0].mxu0
  %445 = vmatprep.mubr.bf16.mxu0 0
  %446 = vmatmul.mubr.bf16.gmra.mrb[0].mxu0 %v281
  %v447 = vpop.f32.mrb[0].mxu0
  %v448 = vadd.f32 %v88, %v447
  %v449 = vpop.f32.mrb[0].mxu0
  %v450 = vpop.f32.mrb[0].mxu0
  %v451 = vadd.f32 %v88, %v450
  %v452 = vpop.f32.mrb[0].mxu0
  %453 = vmatprep.mubr.bf16.mxu0 0
  %454 = vmatmul.mubr.bf16.gmra.mrb[0].mxu0 %v284
  %v455 = vpop.f32.mrb[0].mxu0
  %v456 = vadd.f32 %v88, %v455
  %v457 = vpop.f32.mrb[0].mxu0
  %v458 = vpop.f32.mrb[0].mxu0
  %v459 = vadd.f32 %v88, %v458
  %v460 = vpop.f32.mrb[0].mxu0
  %461 = vmatprep.mubr.bf16.mxu0 0
  %462 = vmatmul.mubr.bf16.gmra.mrb[0].mxu0 %v287
  %v463 = vpop.f32.mrb[0].mxu0
  %v464 = vadd.f32 %v88, %v463
  %v465 = vpop.f32.mrb[0].mxu0
  %v466 = vpop.f32.mrb[0].mxu0
  %v467 = vadd.f32 %v88, %v466
  %v468 = vpop.f32.mrb[0].mxu0
  %469 = vmatprep.mubr.bf16.mxu0 0
  %470 = vmatmul.mubr.bf16.gmra.mrb[0].mxu0 %v290
  %v471 = vpop.f32.mrb[0].mxu0
  %v472 = vadd.f32 %v88, %v471
  %v473 = vpop.f32.mrb[0].mxu0
  %v474 = vpop.f32.mrb[0].mxu0
  %v475 = vadd.f32 %v88, %v474
  %v476 = vpop.f32.mrb[0].mxu0
  %477 = vmatprep.mubr.bf16.mxu0 0
  %478 = vmatmul.mubr.bf16.gmra.mrb[0].mxu0 %v293
  %v479 = vpop.f32.mrb[0].mxu0
  %v480 = vadd.f32 %v88, %v479
  %v481 = vpop.f32.mrb[0].mxu0
  %v482 = vpop.f32.mrb[0].mxu0
  %v483 = vadd.f32 %v88, %v482
  %v484 = vpop.f32.mrb[0].mxu0
  %485 = vmatprep.mubr.bf16.mxu0 0
  %486 = vmatmul.mubr.bf16.gmra.mrb[0].mxu0 %v296
  %v487 = vpop.f32.mrb[0].mxu0
  %v488 = vadd.f32 %v88, %v487
  %v489 = vpop.f32.mrb[0].mxu0
  %v490 = vpop.f32.mrb[0].mxu0
  %v491 = vadd.f32 %v88, %v490
  %v492 = vpop.f32.mrb[0].mxu0
  %493 = vmatprep.mubr.bf16.mxu0 0
  %494 = vmatmul.mubr.bf16.gmra.mrb[0].mxu0 %v299
  %v495 = vpop.f32.mrb[0].mxu0
  %v496 = vadd.f32 %v88, %v495
  %v497 = vpop.f32.mrb[0].mxu0
  %v498 = vpop.f32.mrb[0].mxu0
  %v499 = vadd.f32 %v88, %v498
  %v500 = vpop.f32.mrb[0].mxu0
  %501 = vmatprep.mubr.bf16.mxu0 0
  %502 = vmatmul.mubr.bf16.gmra.mrb[0].mxu0 %v302
  %v503 = vpop.f32.mrb[0].mxu0
  %v504 = vadd.f32 %v88, %v503
  %v505 = vpop.f32.mrb[0].mxu0
  %v506 = vpop.f32.mrb[0].mxu0
  %v507 = vadd.f32 %v88, %v506
  %v508 = vpop.f32.mrb[0].mxu0
  %509 = vmatprep.mubr.bf16.mxu0 0
  %510 = vmatmul.mubr.bf16.gmra.mrb[0].mxu0 %v305
  %v511 = vpop.f32.mrb[0].mxu0
  %v512 = vadd.f32 %v88, %v511
  %v513 = vpop.f32.mrb[0].mxu0
  %v514 = vpop.f32.mrb[0].mxu0
  %v515 = vadd.f32 %v88, %v514
  %v516 = vpop.f32.mrb[0].mxu0
  %517 = vmatprep.mubr.bf16.mxu0 0
  %518 = vmatmul.mubr.bf16.gmra.mrb[0].mxu0 %v308
  %v519 = vpop.f32.mrb[0].mxu0
  %v520 = vadd.f32 %v88, %v519
  %v521 = vpop.f32.mrb[0].mxu0
  %v522 = vpop.f32.mrb[0].mxu0
  %v523 = vadd.f32 %v88, %v522
  %v524 = vpop.f32.mrb[0].mxu0
  %525 = vmatprep.mubr.bf16.mxu0 0
  %526 = vmatmul.mubr.bf16.gmra.mrb[0].mxu0 %v311
  %v527 = vpop.f32.mrb[0].mxu0
  %v528 = vadd.f32 %v88, %v527
  %v529 = vpop.f32.mrb[0].mxu0
  %v530 = vpop.f32.mrb[0].mxu0
  %v531 = vadd.f32 %v88, %v530
  %v532 = vpop.f32.mrb[0].mxu0
  %533 = vmatprep.mubr.bf16.mxu0 0
  %534 = vmatmul.mubr.bf16.gmra.mrb[0].mxu0 %v314
  %v535 = vpop.f32.mrb[0].mxu0
  %v536 = vadd.f32 %v88, %v535
  %v537 = vpop.f32.mrb[0].mxu0
  %v538 = vpop.f32.mrb[0].mxu0
  %v539 = vadd.f32 %v88, %v538
  %v540 = vpop.f32.mrb[0].mxu0
  %541 = vmatprep.mubr.bf16.mxu0 0
  %542 = vmatmul.mubr.bf16.gmra.mrb[0].mxu0 %v317
  %v543 = vpop.f32.mrb[0].mxu0
  %v544 = vadd.f32 %v88, %v543
  %v545 = vpop.f32.mrb[0].mxu0
  %v546 = vpop.f32.mrb[0].mxu0
  %v547 = vadd.f32 %v88, %v546
  %v548 = vpop.f32.mrb[0].mxu0
  %549 = vmatprep.mubr.bf16.mxu0 0
  %550 = vmatmul.mubr.bf16.gmra.mrb[0].mxu0 %v320
  %v551 = vpop.f32.mrb[0].mxu0
  %v552 = vadd.f32 %v88, %v551
  %v553 = vpop.f32.mrb[0].mxu0
  %v554 = vpop.f32.mrb[0].mxu0
  %v555 = vadd.f32 %v88, %v554
  %v556 = vpop.f32.mrb[0].mxu0
  %557 = vmatprep.mubr.bf16.mxu0 0
  %558 = vmatmul.mubr.bf16.gmra.mrb[0].mxu0 %v323
  %v559 = vpop.f32.mrb[0].mxu0
  %v560 = vadd.f32 %v88, %v559
  %v561 = vpop.f32.mrb[0].mxu0
  %v562 = vpop.f32.mrb[0].mxu0
  %v563 = vadd.f32 %v88, %v562
  %v564 = vpop.f32.mrb[0].mxu0
  %565 = vmatprep.mubr.bf16.mxu0 0
  %566 = vmatmul.mubr.bf16.gmra.mrb[0].mxu0 %v326
  %v567 = vpop.f32.mrb[0].mxu0
  %v568 = vadd.f32 %v88, %v567
  %v569 = vpop.f32.mrb[0].mxu0
  %v570 = vpop.f32.mrb[0].mxu0
  %v571 = vadd.f32 %v88, %v570
  %v572 = vpop.f32.mrb[0].mxu0
  %573 = vmatprep.mubr.bf16.mxu0 0
  %574 = vmatmul.mubr.bf16.gmra.mrb[0].mxu0 %v329
  %v575 = vpop.f32.mrb[0].mxu0
  %v576 = vadd.f32 %v88, %v575
  %v577 = vpop.f32.mrb[0].mxu0
  %v578 = vpop.f32.mrb[0].mxu0
  %v579 = vadd.f32 %v88, %v578
  %v580 = vpop.f32.mrb[0].mxu0
  %581 = vmatprep.mubr.bf16.mxu0 0
  %582 = vmatmul.mubr.bf16.gmra.mrb[0].mxu0 %v332
  %v583 = vpop.f32.mrb[0].mxu0
  %v584 = vadd.f32 %v88, %v583
  %v585 = vpop.f32.mrb[0].mxu0
  %v586 = vpop.f32.mrb[0].mxu0
  %v587 = vadd.f32 %v88, %v586
  %v588 = vpop.f32.mrb[0].mxu0
  %589 = vmatprep.mubr.bf16.mxu0 0
  %590 = vmatmul.mubr.bf16.gmra.mrb[0].mxu0 %v335
  %v591 = vpop.f32.mrb[0].mxu0
  %v592 = vadd.f32 %v88, %v591
  %v593 = vpop.f32.mrb[0].mxu0
  %v594 = vpop.f32.mrb[0].mxu0
  %v595 = vadd.f32 %v88, %v594
  %v596 = vpop.f32.mrb[0].mxu0
  %597 = vmatprep.mubr.bf16.mxu0 0
  %598 = vmatmul.mubr.bf16.gmra.mrb[0].mxu0 %v338
  %v599 = vpop.f32.mrb[0].mxu0
  %v600 = vadd.f32 %v88, %v599
  %v601 = vpop.f32.mrb[0].mxu0
  %v602 = vpop.f32.mrb[0].mxu0
  %v603 = vadd.f32 %v88, %v602
  %v604 = vpop.f32.mrb[0].mxu0
  %605 = vmatprep.mubr.bf16.mxu0 0
  %606 = vmatmul.mubr.bf16.gmra.mrb[0].mxu0 %v341
  %v607 = vpop.f32.mrb[0].mxu0
  %v608 = vadd.f32 %v88, %v607
  %v609 = vpop.f32.mrb[0].mxu0
  %v610 = vpop.f32.mrb[0].mxu0
  %v611 = vadd.f32 %v88, %v610
  %v612 = vpop.f32.mrb[0].mxu0
  %613 = vmatprep.mubr.bf16.mxu0 0
  %614 = vmatmul.mubr.bf16.gmra.mrb[0].mxu0 %v344
  %v615 = vpop.f32.mrb[0].mxu0
  %v616 = vadd.f32 %v88, %v615
  %v617 = vpop.f32.mrb[0].mxu0
  %v618 = vpop.f32.mrb[0].mxu0
  %v619 = vadd.f32 %v88, %v618
  %v620 = vpop.f32.mrb[0].mxu0
  %621 = vmatprep.mubr.bf16.mxu0 0
  %622 = vmatmul.mubr.bf16.gmra.mrb[0].mxu0 %v347
  %v623 = vpop.f32.mrb[0].mxu0
  %v624 = vadd.f32 %v88, %v623
  %v625 = vpop.f32.mrb[0].mxu0
  %v626 = vpop.f32.mrb[0].mxu0
  %v627 = vadd.f32 %v88, %v626
  %v628 = vpop.f32.mrb[0].mxu0
  %629 = vmatprep.mubr.bf16.mxu0 0
  %630 = vmatmul.mubr.bf16.gmra.mrb[0].mxu0 %v350
  %v631 = vpop.f32.mrb[0].mxu0
  %v632 = vadd.f32 %v88, %v631
  %v633 = vpop.f32.mrb[0].mxu0
  %v634 = vpop.f32.mrb[0].mxu0
  %v635 = vadd.f32 %v88, %v634
  %v636 = vpop.f32.mrb[0].mxu0
  %637 = vmatprep.mubr.bf16.mxu0 0
  %638 = vmatmul.mubr.bf16.gmra.mrb[0].mxu0 %v353
  %v639 = vpop.f32.mrb[0].mxu0
  %v640 = vadd.f32 %v88, %v639
  %v641 = vpop.f32.mrb[0].mxu0
  %v642 = vpop.f32.mrb[0].mxu0
  %v643 = vadd.f32 %v88, %v642
  %v644 = vpop.f32.mrb[0].mxu0
  %645 = vmatprep.mubr.bf16.mxu0 0
  %646 = vmatmul.mubr.bf16.gmra.mrb[0].mxu0 %v356
  %v647 = vpop.f32.mrb[0].mxu0
  %v648 = vadd.f32 %v88, %v647
  %v649 = vpop.f32.mrb[0].mxu0
  %v650 = vpop.f32.mrb[0].mxu0
  %v651 = vadd.f32 %v88, %v650
  %v652 = vpop.f32.mrb[0].mxu0
  %653 = vdwg.mxu0
  %v654 = vmax.f32 %v400, 0.0
  %v655 = vmax.f32 %v403, 0.0
  %v656 = vmax.f32 %v408, 0.0
  %v657 = vmax.f32 %v411, 0.0
  %v658 = vmax.f32 %v416, 0.0
  %v659 = vmax.f32 %v419, 0.0
  %v660 = vmax.f32 %v424, 0.0
  %v661 = vmax.f32 %v427, 0.0
  %v662 = vmax.f32 %v432, 0.0
  %v663 = vmax.f32 %v435, 0.0
  %v664 = vmax.f32 %v440, 0.0
  %v665 = vmax.f32 %v443, 0.0
  %v666 = vmax.f32 %v448, 0.0
  %v667 = vmax.f32 %v451, 0.0
  %v668 = vmax.f32 %v456, 0.0
  %v669 = vmax.f32 %v459, 0.0
  %v670 = vmax.f32 %v464, 0.0
  %v671 = vmax.f32 %v467, 0.0
  %v672 = vmax.f32 %v472, 0.0
  %v673 = vmax.f32 %v475, 0.0
  %v674 = vmax.f32 %v480, 0.0
  %v675 = vmax.f32 %v483, 0.0
  %v676 = vmax.f32 %v488, 0.0
  %v677 = vmax.f32 %v491, 0.0
  %v678 = vmax.f32 %v496, 0.0
  %v679 = vmax.f32 %v499, 0.0
  %v680 = vmax.f32 %v504, 0.0
  %v681 = vmax.f32 %v507, 0.0
  %v682 = vmax.f32 %v512, 0.0
  %v683 = vmax.f32 %v515, 0.0
  %v684 = vmax.f32 %v520, 0.0
  %v685 = vmax.f32 %v523, 0.0
  %v686 = vmax.f32 %v528, 0.0
  %v687 = vmax.f32 %v531, 0.0
  %v688 = vmax.f32 %v536, 0.0
  %v689 = vmax.f32 %v539, 0.0
  %v690 = vmax.f32 %v544, 0.0
  %v691 = vmax.f32 %v547, 0.0
  %v692 = vmax.f32 %v552, 0.0
  %v693 = vmax.f32 %v555, 0.0
  %v694 = vmax.f32 %v560, 0.0
  %v695 = vmax.f32 %v563, 0.0
  %v696 = vmax.f32 %v568, 0.0
  %v697 = vmax.f32 %v571, 0.0
  %v698 = vmax.f32 %v576, 0.0
  %v699 = vmax.f32 %v579, 0.0
  %v700 = vmax.f32 %v584, 0.0
  %v701 = vmax.f32 %v587, 0.0
  %v702 = vmax.f32 %v592, 0.0
  %v703 = vmax.f32 %v595, 0.0
  %v704 = vmax.f32 %v600, 0.0
  %v705 = vmax.f32 %v603, 0.0
  %v706 = vmax.f32 %v608, 0.0
  %v707 = vmax.f32 %v611, 0.0
  %v708 = vmax.f32 %v616, 0.0
  %v709 = vmax.f32 %v619, 0.0
  %v710 = vmax.f32 %v624, 0.0
  %v711 = vmax.f32 %v627, 0.0
  %v712 = vmax.f32 %v632, 0.0
  %v713 = vmax.f32 %v635, 0.0
  %v714 = vmax.f32 %v640, 0.0
  %v715 = vmax.f32 %v643, 0.0
  %v716 = vmax.f32 %v648, 0.0
  %v717 = vmax.f32 %v651, 0.0
  %v718 = vmin.f32 %v654, 6.0
  %v719 = vmin.f32 %v655, 6.0
  %v720 = vmin.f32 %v656, 6.0
  %v721 = vmin.f32 %v657, 6.0
  %v722 = vmin.f32 %v658, 6.0
  %v723 = vmin.f32 %v659, 6.0
  %v724 = vmin.f32 %v660, 6.0
  %v725 = vmin.f32 %v661, 6.0
  %v726 = vmin.f32 %v662, 6.0
  %v727 = vmin.f32 %v663, 6.0
  %v728 = vmin.f32 %v664, 6.0
  %v729 = vmin.f32 %v665, 6.0
  %v730 = vmin.f32 %v666, 6.0
  %v731 = vmin.f32 %v667, 6.0
  %v732 = vmin.f32 %v668, 6.0
  %v733 = vmin.f32 %v669, 6.0
  %v734 = vmin.f32 %v670, 6.0
  %v735 = vmin.f32 %v671, 6.0
  %v736 = vmin.f32 %v672, 6.0
  %v737 = vmin.f32 %v673, 6.0
  %v738 = vmin.f32 %v674, 6.0
  %v739 = vmin.f32 %v675, 6.0
  %v740 = vmin.f32 %v676, 6.0
  %v741 = vmin.f32 %v677, 6.0
  %v742 = vmin.f32 %v678, 6.0
  %v743 = vmin.f32 %v679, 6.0
  %v744 = vmin.f32 %v680, 6.0
  %v745 = vmin.f32 %v681, 6.0
  %v746 = vmin.f32 %v682, 6.0
  %v747 = vmin.f32 %v683, 6.0
  %v748 = vmin.f32 %v684, 6.0
  %v749 = vmin.f32 %v685, 6.0
  %v750 = vmin.f32 %v686, 6.0
  %v751 = vmin.f32 %v687, 6.0
  %v752 = vmin.f32 %v688, 6.0
  %v753 = vmin.f32 %v689, 6.0
  %v754 = vmin.f32 %v690, 6.0
  %v755 = vmin.f32 %v691, 6.0
  %v756 = vmin.f32 %v692, 6.0
  %v757 = vmin.f32 %v693, 6.0
  %v758 = vmin.f32 %v694, 6.0
  %v759 = vmin.f32 %v695, 6.0
  %v760 = vmin.f32 %v696, 6.0
  %v761 = vmin.f32 %v697, 6.0
  %v762 = vmin.f32 %v698, 6.0
  %v763 = vmin.f32 %v699, 6.0
  %v764 = vmin.f32 %v700, 6.0
  %v765 = vmin.f32 %v701, 6.0
  %v766 = vmin.f32 %v702, 6.0
  %v767 = vmin.f32 %v703, 6.0
  %v768 = vmin.f32 %v704, 6.0
  %v769 = vmin.f32 %v705, 6.0
  %v770 = vmin.f32 %v706, 6.0
  %v771 = vmin.f32 %v707, 6.0
  %v772 = vmin.f32 %v708, 6.0
  %v773 = vmin.f32 %v709, 6.0
  %v774 = vmin.f32 %v710, 6.0
  %v775 = vmin.f32 %v711, 6.0
  %v776 = vmin.f32 %v712, 6.0
  %v777 = vmin.f32 %v713, 6.0
  %v778 = vmin.f32 %v714, 6.0
  %v779 = vmin.f32 %v715, 6.0
  %v780 = vmin.f32 %v716, 6.0
  %v781 = vmin.f32 %v717, 6.0
  %v782 = vpack.c.bf16 %v719, %v718
  %v783 = vpack.c.bf16 %v721, %v720
  %v784 = vpack.c.bf16 %v723, %v722
  %v785 = vpack.c.bf16 %v725, %v724
  %v786 = vpack.c.bf16 %v727, %v726
  %v787 = vpack.c.bf16 %v729, %v728
  %v788 = vpack.c.bf16 %v731, %v730
  %v789 = vpack.c.bf16 %v733, %v732
  %v790 = vpack.c.bf16 %v735, %v734
  %v791 = vpack.c.bf16 %v737, %v736
  %v792 = vpack.c.bf16 %v739, %v738
  %v793 = vpack.c.bf16 %v741, %v740
  %v794 = vpack.c.bf16 %v743, %v742
  %v795 = vpack.c.bf16 %v745, %v744
  %v796 = vpack.c.bf16 %v747, %v746
  %v797 = vpack.c.bf16 %v749, %v748
  %v798 = vpack.c.bf16 %v751, %v750
  %v799 = vpack.c.bf16 %v753, %v752
  %v800 = vpack.c.bf16 %v755, %v754
  %v801 = vpack.c.bf16 %v757, %v756
  %v802 = vpack.c.bf16 %v759, %v758
  %v803 = vpack.c.bf16 %v761, %v760
  %v804 = vpack.c.bf16 %v763, %v762
  %v805 = vpack.c.bf16 %v765, %v764
  %v806 = vpack.c.bf16 %v767, %v766
  %v807 = vpack.c.bf16 %v769, %v768
  %v808 = vpack.c.bf16 %v771, %v770
  %v809 = vpack.c.bf16 %v773, %v772
  %v810 = vpack.c.bf16 %v775, %v774
  %v811 = vpack.c.bf16 %v777, %v776
  %v812 = vpack.c.bf16 %v779, %v778
  %v813 = vpack.c.bf16 %v781, %v780
  %v846 = vunpack.c.l.b16 %v782
  %v847 = vunpack.c.h.b16 %v782
  %v848 = vunpack.c.l.b16 %v783
  %v849 = vunpack.c.h.b16 %v783
  %v850 = vunpack.c.l.b16 %v784
  %v851 = vunpack.c.h.b16 %v784
  %v852 = vunpack.c.l.b16 %v785
  %v853 = vunpack.c.h.b16 %v785
  %v854 = vunpack.c.l.b16 %v786
  %v855 = vunpack.c.h.b16 %v786
  %v856 = vunpack.c.l.b16 %v787
  %v857 = vunpack.c.h.b16 %v787
  %v858 = vunpack.c.l.b16 %v788
  %v859 = vunpack.c.h.b16 %v788
  %v860 = vunpack.c.l.b16 %v789
  %v861 = vunpack.c.h.b16 %v789
  %v862 = vunpack.c.l.b16 %v790
  %v863 = vunpack.c.h.b16 %v790
  %v864 = vunpack.c.l.b16 %v791
  %v865 = vunpack.c.h.b16 %v791
  %v866 = vunpack.c.l.b16 %v792
  %v867 = vunpack.c.h.b16 %v792
  %v868 = vunpack.c.l.b16 %v793
  %v869 = vunpack.c.h.b16 %v793
  %v870 = vunpack.c.l.b16 %v794
  %v871 = vunpack.c.h.b16 %v794
  %v872 = vunpack.c.l.b16 %v795
  %v873 = vunpack.c.h.b16 %v795
  %v874 = vunpack.c.l.b16 %v796
  %v875 = vunpack.c.h.b16 %v796
  %v876 = vunpack.c.l.b16 %v797
  %v877 = vunpack.c.h.b16 %v797
  %v878 = vunpack.c.l.b16 %v798
  %v879 = vunpack.c.h.b16 %v798
  %v880 = vunpack.c.l.b16 %v799
  %v881 = vunpack.c.h.b16 %v799
  %v882 = vunpack.c.l.b16 %v800
  %v883 = vunpack.c.h.b16 %v800
  %v884 = vunpack.c.l.b16 %v801
  %v885 = vunpack.c.h.b16 %v801
  %v886 = vunpack.c.l.b16 %v802
  %v887 = vunpack.c.h.b16 %v802
  %v888 = vunpack.c.l.b16 %v803
  %v889 = vunpack.c.h.b16 %v803
  %v890 = vunpack.c.l.b16 %v804
  %v891 = vunpack.c.h.b16 %v804
  %v892 = vunpack.c.l.b16 %v805
  %v893 = vunpack.c.h.b16 %v805
  %v894 = vunpack.c.l.b16 %v806
  %v895 = vunpack.c.h.b16 %v806
  %v896 = vunpack.c.l.b16 %v807
  %v897 = vunpack.c.h.b16 %v807
  %v898 = vunpack.c.l.b16 %v808
  %v899 = vunpack.c.h.b16 %v808
  %v900 = vunpack.c.l.b16 %v809
  %v901 = vunpack.c.h.b16 %v809
  %v902 = vunpack.c.l.b16 %v810
  %v903 = vunpack.c.h.b16 %v810
  %v904 = vunpack.c.l.b16 %v811
  %v905 = vunpack.c.h.b16 %v811
  %v906 = vunpack.c.l.b16 %v812
  %v907 = vunpack.c.h.b16 %v812
  %v908 = vunpack.c.l.b16 %v813
  %v909 = vunpack.c.h.b16 %v813
  %v910 = vpack.c.b16 %v846, %v846
  %v911 = vpack.c.b16 %v847, %v847
  %v912 = vpack.c.b16 %v848, %v848
  %v913 = vpack.c.b16 %v849, %v849
  %v914 = vpack.c.b16 %v850, %v850
  %v915 = vpack.c.b16 %v851, %v851
  %v916 = vpack.c.b16 %v852, %v852
  %v917 = vpack.c.b16 %v853, %v853
  %v918 = vpack.c.b16 %v854, %v854
  %v919 = vpack.c.b16 %v855, %v855
  %v920 = vpack.c.b16 %v856, %v856
  %v921 = vpack.c.b16 %v857, %v857
  %v922 = vpack.c.b16 %v858, %v858
  %v923 = vpack.c.b16 %v859, %v859
  %v924 = vpack.c.b16 %v860, %v860
  %v925 = vpack.c.b16 %v861, %v861
  %v926 = vpack.c.b16 %v862, %v862
  %v927 = vpack.c.b16 %v863, %v863
  %v928 = vpack.c.b16 %v864, %v864
  %v929 = vpack.c.b16 %v865, %v865
  %v930 = vpack.c.b16 %v866, %v866
  %v931 = vpack.c.b16 %v867, %v867
  %v932 = vpack.c.b16 %v868, %v868
  %v933 = vpack.c.b16 %v869, %v869
  %v934 = vpack.c.b16 %v870, %v870
  %v935 = vpack.c.b16 %v871, %v871
  %v936 = vpack.c.b16 %v872, %v872
  %v937 = vpack.c.b16 %v873, %v873
  %v938 = vpack.c.b16 %v874, %v874
  %v939 = vpack.c.b16 %v875, %v875
  %v940 = vpack.c.b16 %v876, %v876
  %v941 = vpack.c.b16 %v877, %v877
  %v942 = vpack.c.b16 %v878, %v878
  %v943 = vpack.c.b16 %v879, %v879
  %v944 = vpack.c.b16 %v880, %v880
  %v945 = vpack.c.b16 %v881, %v881
  %v946 = vpack.c.b16 %v882, %v882
  %v947 = vpack.c.b16 %v883, %v883
  %v948 = vpack.c.b16 %v884, %v884
  %v949 = vpack.c.b16 %v885, %v885
  %v950 = vpack.c.b16 %v886, %v886
  %v951 = vpack.c.b16 %v887, %v887
  %v952 = vpack.c.b16 %v888, %v888
  %v953 = vpack.c.b16 %v889, %v889
  %v954 = vpack.c.b16 %v890, %v890
  %v955 = vpack.c.b16 %v891, %v891
  %v956 = vpack.c.b16 %v892, %v892
  %v957 = vpack.c.b16 %v893, %v893
  %v958 = vpack.c.b16 %v894, %v894
  %v959 = vpack.c.b16 %v895, %v895
  %v960 = vpack.c.b16 %v896, %v896
  %v961 = vpack.c.b16 %v897, %v897
  %v962 = vpack.c.b16 %v898, %v898
  %v963 = vpack.c.b16 %v899, %v899
  %v964 = vpack.c.b16 %v900, %v900
  %v965 = vpack.c.b16 %v901, %v901
  %v966 = vpack.c.b16 %v902, %v902
  %v967 = vpack.c.b16 %v903, %v903
  %v968 = vpack.c.b16 %v904, %v904
  %v969 = vpack.c.b16 %v905, %v905
  %v970 = vpack.c.b16 %v906, %v906
  %v971 = vpack.c.b16 %v907, %v907
  %v972 = vpack.c.b16 %v908, %v908
  %v973 = vpack.c.b16 %v909, %v909
  %vm1038 = vcmask 257024
  %1039 = vst.msk [vmem:[%s3] sm:$0xf] %vm1038, %v910
  %1040 = vst.msk [vmem:[%s3 + $0x4] sm:$0xf] %vm1038, %v911
  %1041 = vst.msk [vmem:[%s3 + $0x8] sm:$0xf] %vm1038, %v912
  %1042 = vst.msk [vmem:[%s3 + $0xc] sm:$0xf] %vm1038, %v913
  %1043 = vst.msk [vmem:[%s3 + $0x10] sm:$0xf] %vm1038, %v914
  %1044 = vst.msk [vmem:[%s3 + $0x14] sm:$0xf] %vm1038, %v915
  %1045 = vst.msk [vmem:[%s3 + $0x18] sm:$0xf] %vm1038, %v916
  %1046 = vst.msk [vmem:[%s3 + $0x1c] sm:$0xf] %vm1038, %v917
  %1047 = vst.msk [vmem:[%s3 + $0x20] sm:$0xf] %vm1038, %v918
  %1048 = vst.msk [vmem:[%s3 + $0x24] sm:$0xf] %vm1038, %v919
  %1049 = vst.msk [vmem:[%s3 + $0x28] sm:$0xf] %vm1038, %v920
  %1050 = vst.msk [vmem:[%s3 + $0x2c] sm:$0xf] %vm1038, %v921
  %1051 = vst.msk [vmem:[%s3 + $0x30] sm:$0xf] %vm1038, %v922
  %1052 = vst.msk [vmem:[%s3 + $0x34] sm:$0xf] %vm1038, %v923
  %1053 = vst.msk [vmem:[%s3 + $0x38] sm:$0xf] %vm1038, %v924
  %1054 = vst.msk [vmem:[%s3 + $0x3c] sm:$0xf] %vm1038, %v925
  %1055 = vst.msk [vmem:[%s3 + $0x40] sm:$0xf] %vm1038, %v926
  %1056 = vst.msk [vmem:[%s3 + $0x44] sm:$0xf] %vm1038, %v927
  %1057 = vst.msk [vmem:[%s3 + $0x48] sm:$0xf] %vm1038, %v928
  %1058 = vst.msk [vmem:[%s3 + $0x4c] sm:$0xf] %vm1038, %v929
  %1059 = vst.msk [vmem:[%s3 + $0x50] sm:$0xf] %vm1038, %v930
  %1060 = vst.msk [vmem:[%s3 + $0x54] sm:$0xf] %vm1038, %v931
  %1061 = vst.msk [vmem:[%s3 + $0x58] sm:$0xf] %vm1038, %v932
  %1062 = vst.msk [vmem:[%s3 + $0x5c] sm:$0xf] %vm1038, %v933
  %1063 = vst.msk [vmem:[%s3 + $0x60] sm:$0xf] %vm1038, %v934
  %1064 = vst.msk [vmem:[%s3 + $0x64] sm:$0xf] %vm1038, %v935
  %1065 = vst.msk [vmem:[%s3 + $0x68] sm:$0xf] %vm1038, %v936
  %1066 = vst.msk [vmem:[%s3 + $0x6c] sm:$0xf] %vm1038, %v937
  %1067 = vst.msk [vmem:[%s3 + $0x70] sm:$0xf] %vm1038, %v938
  %1068 = vst.msk [vmem:[%s3 + $0x74] sm:$0xf] %vm1038, %v939
  %1069 = vst.msk [vmem:[%s3 + $0x78] sm:$0xf] %vm1038, %v940
  %1070 = vst.msk [vmem:[%s3 + $0x7c] sm:$0xf] %vm1038, %v941
  %1071 = vst.msk [vmem:[%s3 + $0x80] sm:$0xf] %vm1038, %v942
  %1072 = vst.msk [vmem:[%s3 + $0x84] sm:$0xf] %vm1038, %v943
  %1073 = vst.msk [vmem:[%s3 + $0x88] sm:$0xf] %vm1038, %v944
  %1074 = vst.msk [vmem:[%s3 + $0x8c] sm:$0xf] %vm1038, %v945
  %1075 = vst.msk [vmem:[%s3 + $0x90] sm:$0xf] %vm1038, %v946
  %1076 = vst.msk [vmem:[%s3 + $0x94] sm:$0xf] %vm1038, %v947
  %1077 = vst.msk [vmem:[%s3 + $0x98] sm:$0xf] %vm1038, %v948
  %1078 = vst.msk [vmem:[%s3 + $0x9c] sm:$0xf] %vm1038, %v949
  %1079 = vst.msk [vmem:[%s3 + $0xa0] sm:$0xf] %vm1038, %v950
  %1080 = vst.msk [vmem:[%s3 + $0xa4] sm:$0xf] %vm1038, %v951
  %1081 = vst.msk [vmem:[%s3 + $0xa8] sm:$0xf] %vm1038, %v952
  %1082 = vst.msk [vmem:[%s3 + $0xac] sm:$0xf] %vm1038, %v953
  %1083 = vst.msk [vmem:[%s3 + $0xb0] sm:$0xf] %vm1038, %v954
  %1084 = vst.msk [vmem:[%s3 + $0xb4] sm:$0xf] %vm1038, %v955
  %1085 = vst.msk [vmem:[%s3 + $0xb8] sm:$0xf] %vm1038, %v956
  %1086 = vst.msk [vmem:[%s3 + $0xbc] sm:$0xf] %vm1038, %v957
  %1087 = vst.msk [vmem:[%s3 + $0xc0] sm:$0xf] %vm1038, %v958
  %1088 = vst.msk [vmem:[%s3 + $0xc4] sm:$0xf] %vm1038, %v959
  %1089 = vst.msk [vmem:[%s3 + $0xc8] sm:$0xf] %vm1038, %v960
  %1090 = vst.msk [vmem:[%s3 + $0xcc] sm:$0xf] %vm1038, %v961
  %1091 = vst.msk [vmem:[%s3 + $0xd0] sm:$0xf] %vm1038, %v962
  %1092 = vst.msk [vmem:[%s3 + $0xd4] sm:$0xf] %vm1038, %v963
  %1093 = vst.msk [vmem:[%s3 + $0xd8] sm:$0xf] %vm1038, %v964
  %1094 = vst.msk [vmem:[%s3 + $0xdc] sm:$0xf] %vm1038, %v965
  %1095 = vst.msk [vmem:[%s3 + $0xe0] sm:$0xf] %vm1038, %v966
  %1096 = vst.msk [vmem:[%s3 + $0xe4] sm:$0xf] %vm1038, %v967
  %1097 = vst.msk [vmem:[%s3 + $0xe8] sm:$0xf] %vm1038, %v968
  %1098 = vst.msk [vmem:[%s3 + $0xec] sm:$0xf] %vm1038, %v969
  %1099 = vst.msk [vmem:[%s3 + $0xf0] sm:$0xf] %vm1038, %v970
  %1100 = vst.msk [vmem:[%s3 + $0xf4] sm:$0xf] %vm1038, %v971
  %1101 = vst.msk [vmem:[%s3 + $0xf8] sm:$0xf] %vm1038, %v972
  %1102 = vst.msk [vmem:[%s3 + $0xfc] sm:$0xf] %vm1038, %v973
  // Predicated region
  $region14: #{tpu_custom_call.1} parent=0 // pred_check
    _
  $region15: #{tpu_custom_call.1} parent=0 // pred_check_branch
    %1104 = sbr.rel (0) target = $region17
  $region16: #{tpu_custom_call.1} parent=0 // pred_region
    _
  $region17: #{tpu_custom_call.1} parent=0 // pred_fallthru
    _
  // Predicated region
  $region18: #{tpu_custom_call.1} parent=0 // pred_check
    _
  $region19: #{tpu_custom_call.1} parent=0 // pred_check_branch
    %1106 = sbr.rel (0) target = $region21
  $region20: #{tpu_custom_call.1} parent=0 // pred_region
    _
  $region21: #{tpu_custom_call.1} parent=0 // pred_fallthru
    _

</llo_original>
